<compile_context>
chip_gen: v7x
topology: tpu7x:2x2x1
jax: 0.10.0
libtpu: 0.0.40
codegen_flags: <defaults>
</compile_context>

<pallas_src>
import functools
import math

import jax
import jax.numpy as jnp
from jax.experimental import pallas as pl
from jax.experimental.pallas import tpu as pltpu


# ------------------------------- helpers ------------------------------------


def _round_up(n, m):
    return ((n + m - 1) // m) * m


def _choose_tile(dim, prefs, align):
    """Return (tile, padded_dim): largest preferred tile dividing dim, else pad."""
    for p in prefs:
        if dim >= p and dim % p == 0:
            return p, dim
    smallest = prefs[-1]
    if dim > smallest:
        return smallest, _round_up(dim, smallest)
    padded = _round_up(dim, align)
    return padded, padded


# --------------------------- tiled linear (MXU) ------------------------------


def _matmul_kernel(*refs, has_bias):
    if has_bias:
        x_ref, w_ref, b_ref, o_ref, acc_ref = refs
    else:
        x_ref, w_ref, o_ref, acc_ref = refs
        b_ref = None

    k = pl.program_id(2)

    @pl.when(k == 0)
    def _init():
        acc_ref[...] = jnp.zeros_like(acc_ref)

    acc_ref[...] += jnp.dot(x_ref[...], w_ref[...],
                            preferred_element_type=jnp.float32)

    @pl.when(k == pl.num_programs(2) - 1)
    def _finish():
        r = acc_ref[...]
        if has_bias:
            r = r + b_ref[...].astype(jnp.float32)
        o_ref[...] = r.astype(o_ref.dtype)


def linear(x, w, b=None, out_dtype=None):
    """x:(..., K) @ w:(K, N) (+ b); bf16 MXU operands, f32 accumulation."""
    orig = x.shape
    K, N = w.shape
    if out_dtype is None:
        out_dtype = x.dtype

    x2 = x.reshape(-1, K).astype(jnp.bfloat16)
    w = w.astype(jnp.bfloat16)
    M = x2.shape[0]

    tm, Mp = _choose_tile(M, (512, 256, 128), 8)
    tn, Np = _choose_tile(N, (512, 256, 128), 128)   # lane-dense output stores
    if K <= 1024:
        tk, Kp = K, K                                 # single K step
    else:
        tk, Kp = _choose_tile(K, (512, 256, 128), 128)

    if Mp != M or Kp != K:
        x2 = jnp.pad(x2, ((0, Mp - M), (0, Kp - K)))
    if Kp != K or Np != N:
        w = jnp.pad(w, ((0, Kp - K), (0, Np - N)))

    has_bias = b is not None
    in_specs = [pl.BlockSpec((tm, tk), lambda i, j, k: (i, k)),
                pl.BlockSpec((tk, tn), lambda i, j, k: (k, j))]
    args = [x2, w]
    if has_bias:
        b = b.astype(jnp.float32)
        if Np != N:
            b = jnp.pad(b, (0, Np - N))
        in_specs.append(pl.BlockSpec((1, tn), lambda i, j, k: (0, j)))
        args.append(b.reshape(1, Np))

    out = pl.pallas_call(
        functools.partial(_matmul_kernel, has_bias=has_bias),
        out_shape=jax.ShapeDtypeStruct((Mp, Np), out_dtype),
        grid=(Mp // tm, Np // tn, Kp // tk),
        in_specs=in_specs,
        out_specs=pl.BlockSpec((tm, tn), lambda i, j, k: (i, j)),
        scratch_shapes=[pltpu.VMEM((tm, tn), jnp.float32)],
        compiler_params=pltpu.CompilerParams(
            dimension_semantics=("parallel", "parallel", "arbitrary")),
    )(*args)

    if Mp != M or Np != N:
        out = out[:M, :N]
    return out.reshape(orig[:-1] + (N,))


# ------------------------ flash multi-head attention -------------------------


def _flash_mha_kernel(q_ref, kv_ref, o_ref, m_sc, l_sc, acc_sc,
                      *, heads, dim_head, kv_len, block_k):
    j = pl.program_id(2)

    @pl.when(j == 0)
    def _init():
        m_sc[...] = jnp.full_like(m_sc, -1e30)     # finite sentinel, no inf-inf
        l_sc[...] = jnp.zeros_like(l_sc)
        acc_sc[...] = jnp.zeros_like(acc_sc)

    need_mask = (kv_len % block_k) != 0
    if need_mask:
        # (1, block_k) lane iota bias, built once per grid step; zero on all
        # non-final kv blocks so the broadcast add is the only per-head cost.
        kv_pos = j * block_k + jax.lax.broadcasted_iota(
            jnp.int32, (1, block_k), 1)
        neg = jnp.where(kv_pos >= kv_len, jnp.float32(-1e30), jnp.float32(0.0))

    v_base = heads * dim_head
    for h in range(heads):              # static unroll; heads stay lane-packed
        lo = h * dim_head
        q = q_ref[0, :, lo:lo + dim_head]                       # (tq, d) bf16
        k = kv_ref[0, :, lo:lo + dim_head]                      # (tk, d) bf16
        v = kv_ref[0, :, v_base + lo:v_base + lo + dim_head]    # (tk, d) bf16

        s = jax.lax.dot_general(q, k, (((1,), (1,)), ((), ())),
                                preferred_element_type=jnp.float32)  # (tq, tk)
        if need_mask:
            s = s + neg

        m_prev = m_sc[h]                                                # (tq, 1)
        m_new = jnp.maximum(m_prev, jnp.max(s, axis=-1, keepdims=True))
        alpha = jnp.exp(m_prev - m_new)
        p = jnp.exp(s - m_new)                                          # f32
        l_sc[h] = alpha * l_sc[h] + jnp.sum(p, axis=-1, keepdims=True)
        acc_sc[h] = alpha * acc_sc[h] + jnp.dot(
            p.astype(jnp.bfloat16), v, preferred_element_type=jnp.float32)
        m_sc[h] = m_new

    @pl.when(j == pl.num_programs(2) - 1)
    def _finish():
        for h in range(heads):
            lo = h * dim_head
            out_h = acc_sc[h] / l_sc[h]          # exact divide; runs once per q tile
            o_ref[0, :, lo:lo + dim_head] = out_h.astype(o_ref.dtype)


def flash_attention(q, kv, *, heads, dim_head):
    """q:(B, Nq, H*D), kv:(B, Nk, 2*H*D) packed [k | v] -> (B, Nq, H*D) bf16.

    Softmax scale is expected to already be folded into q (done in the wrapper).
    """
    B, Nq, HD = q.shape
    Nk = kv.shape[1]
    q = q.astype(jnp.bfloat16)
    kv = kv.astype(jnp.bfloat16)

    # Large q block cuts kv re-stream HBM traffic; VMEM stays small (bf16 tiles).
    tq, Nq_p = _choose_tile(Nq, (1024, 512, 256, 128), 8)
    tk, Nk_p = _choose_tile(Nk, (512, 256, 128), 128)

    if Nq_p != Nq:
        q = jnp.pad(q, ((0, 0), (0, Nq_p - Nq), (0, 0)))
    if Nk_p != Nk:
        kv = jnp.pad(kv, ((0, 0), (0, Nk_p - Nk), (0, 0)))

    out = pl.pallas_call(
        functools.partial(_flash_mha_kernel, heads=heads, dim_head=dim_head,
                          kv_len=Nk, block_k=tk),
        out_shape=jax.ShapeDtypeStruct((B, Nq_p, HD), jnp.bfloat16),
        grid=(B, Nq_p // tq, Nk_p // tk),
        in_specs=[pl.BlockSpec((1, tq, HD), lambda b, i, j: (b, i, 0)),
                  pl.BlockSpec((1, tk, 2 * HD), lambda b, i, j: (b, j, 0))],
        out_specs=pl.BlockSpec((1, tq, HD), lambda b, i, j: (b, i, 0)),
        scratch_shapes=[pltpu.VMEM((heads, tq, 1), jnp.float32),
                        pltpu.VMEM((heads, tq, 1), jnp.float32),
                        pltpu.VMEM((heads, tq, dim_head), jnp.float32)],
        compiler_params=pltpu.CompilerParams(
            dimension_semantics=("parallel", "parallel", "arbitrary")),
    )(q, kv)

    if Nq_p != Nq:
        out = out[:, :Nq, :]
    return out


# --------------------------- module forward pass -----------------------------


def memory_efficient_cross_attention(x, params, *, heads, dim_head, context=None):
    """MemoryEfficientCrossAttention.forward (mask=None, dropout=0)."""
    if context is None:
        context = x
    scale = 1.0 / math.sqrt(dim_head)
    # Softmax scale folded into the q projection weight (zero in-kernel cost).
    q = linear(x, params["to_q_w"] * scale, out_dtype=jnp.bfloat16)      # (B,Lq,inner)
    kv = linear(context, params["to_kv_w"], out_dtype=jnp.bfloat16)      # (B,Lk,2*inner)
    out = flash_attention(q, kv, heads=heads, dim_head=dim_head)         # (B,Lq,inner)
    return linear(out, params["to_out_w"], params["to_out_b"],
                  out_dtype=x.dtype)                                     # (B,Lq,query_dim)


# ----------------------------- pure-JAX reference ----------------------------


def _reference(x, context, params, heads, dim_head):
    inner = heads * dim_head
    q = x @ params["to_q_w"]
    kvp = context @ params["to_kv_w"]
    k, v = kvp[..., :inner], kvp[..., inner:]

    def split(t):
        b, l, _ = t.shape
        return t.reshape(b, l, heads, dim_head).transpose(0, 2, 1, 3)

    qh, kh, vh = split(q), split(k), split(v)
    s = jnp.einsum("bhqd,bhkd->bhqk", qh, kh) / jnp.sqrt(float(dim_head))
    p = jax.nn.softmax(s, axis=-1)
    o = jnp.einsum("bhqk,bhkd->bhqd", p, vh)
    o = o.transpose(0, 2, 1, 3).reshape(x.shape[0], x.shape[1], inner)
    return o @ params["to_out_w"] + params["to_out_b"]


# ----------------------------------- main ------------------------------------


if __name__ == "__main__":
    B, Lq, Lk = 2, 64, 24                 # Lk non-multiple of 128 exercises kv masking
    query_dim, context_dim = 32, 16
    heads, dim_head = 4, 8                # inner_dim = 32
    inner = heads * dim_head

    key = jax.random.PRNGKey(0)
    kx, kc, kq, kk, kv_, ko, kb = jax.random.split(key, 7)
    x = jax.random.normal(kx, (B, Lq, query_dim), jnp.float32)
    context = jax.random.normal(kc, (B, Lk, context_dim), jnp.float32)

    params = {
        # nn.Linear(query_dim, inner, bias=False)
        "to_q_w": jax.random.normal(kq, (query_dim, inner), jnp.float32)
                  / jnp.sqrt(jnp.float32(query_dim)),
        # fused [to_k | to_v] : nn.Linear(context_dim, inner, bias=False) x2
        "to_kv_w": jnp.concatenate(
            [jax.random.normal(kk, (context_dim, inner), jnp.float32),
             jax.random.normal(kv_, (context_dim, inner), jnp.float32)], axis=1)
            / jnp.sqrt(jnp.float32(context_dim)),
        # to_out = nn.Linear(inner, query_dim) (+ Dropout(0.0) == identity)
        "to_out_w": jax.random.normal(ko, (inner, query_dim), jnp.float32)
                    / jnp.sqrt(jnp.float32(inner)),
        "to_out_b": jax.random.normal(kb, (query_dim,), jnp.float32) * 0.02,
    }

    out = memory_efficient_cross_attention(
        x, params, heads=heads, dim_head=dim_head, context=context)
    out = jax.block_until_ready(out)

    assert out.shape == (B, Lq, query_dim) and out.dtype == jnp.float32
    ref = _reference(x, context, params, heads, dim_head)
    # bf16 MXU operands (f32 accumulation) -> ~1% level error vs. fp32 reference
    assert jnp.allclose(out, ref, atol=3e-2, rtol=3e-2), "mismatch vs. pure-JAX reference"

    print("KERNEL_OK")
</pallas_src>

<mosaic_0001>
module attributes {stable_mosaic.version = 11 : i64} {
  func.func @_matmul_kernel(%arg0: i32, %arg1: i32, %arg2: i32, %arg3: memref<128x32xbf16, #tpu.memory_space<vmem>>, %arg4: memref<32x128xbf16, #tpu.memory_space<vmem>>, %arg5: memref<128x128xbf16, #tpu.memory_space<vmem>>, %arg6: memref<128x128xf32, #tpu.memory_space<vmem>>) attributes {dimension_semantics = [#tpu.dimension_semantics<parallel>, #tpu.dimension_semantics<parallel>, #tpu.dimension_semantics<arbitrary>], iteration_bounds = array<i64: 1, 1, 1>, scalar_prefetch = 0 : i64, scratch_operands = 1 : i64, tpu.core_type = #tpu.core_type<tc>, window_params = [{transform_indices = @transform_0, window_bounds = array<i64: 128, 32>}, {transform_indices = @transform_1, window_bounds = array<i64: 32, 128>}, {transform_indices = @transform_2, window_bounds = array<i64: 128, 128>}]} {
    %c0_i32 = arith.constant 0 : i32
    %0 = arith.cmpi eq, %arg2, %c0_i32 : i32
    %1 = arith.extui %0 : i1 to i32
    %c0_i32_0 = arith.constant 0 : i32
    %2 = arith.cmpi ne, %1, %c0_i32_0 : i32
    scf.if %2 {
      %cst_10 = arith.constant 0.000000e+00 : f32
      %12 = vector.broadcast %cst_10 : f32 to vector<128x128xf32>
      %c0_11 = arith.constant 0 : index
      %c0_12 = arith.constant 0 : index
      %13 = vector.load %arg6[%c0_11, %c0_12] : memref<128x128xf32, #tpu.memory_space<vmem>>, vector<128x128xf32>
      tpu.vector_store %arg6[%c0_11, %c0_12], %12 {strides = array<i32>} : memref<128x128xf32, #tpu.memory_space<vmem>>, vector<128x128xf32>,
    } else {
    }
    %c0 = arith.constant 0 : index
    %c0_1 = arith.constant 0 : index
    %3 = vector.load %arg6[%c0, %c0_1] : memref<128x128xf32, #tpu.memory_space<vmem>>, vector<128x128xf32>
    %c0_2 = arith.constant 0 : index
    %c0_3 = arith.constant 0 : index
    %4 = vector.load %arg3[%c0_2, %c0_3] : memref<128x32xbf16, #tpu.memory_space<vmem>>, vector<128x32xbf16>
    %c0_4 = arith.constant 0 : index
    %c0_5 = arith.constant 0 : index
    %5 = vector.load %arg4[%c0_4, %c0_5] : memref<32x128xbf16, #tpu.memory_space<vmem>>, vector<32x128xbf16>
    %cst = arith.constant dense<0.000000e+00> : vector<128x128xf32>
    %6 = tpu.matmul %4, %5, %cst {dimension_numbers = #tpu.dot_dimension_numbers<[1], [0], [0], [1], [0, 0, 1, 1], [], []>} : vector<128x32xbf16>, vector<32x128xbf16>, vector<128x128xf32> -> vector<128x128xf32>
    %7 = arith.addf %3, %6 : vector<128x128xf32>
    %c0_6 = arith.constant 0 : index
    %c0_7 = arith.constant 0 : index
    %8 = vector.load %arg6[%c0_6, %c0_7] : memref<128x128xf32, #tpu.memory_space<vmem>>, vector<128x128xf32>
    tpu.vector_store %arg6[%c0_6, %c0_7], %7 {strides = array<i32>} : memref<128x128xf32, #tpu.memory_space<vmem>>, vector<128x128xf32>,
    %c0_i32_8 = arith.constant 0 : i32
    %9 = arith.cmpi eq, %arg2, %c0_i32_8 : i32
    %10 = arith.extui %9 : i1 to i32
    %c0_i32_9 = arith.constant 0 : i32
    %11 = arith.cmpi ne, %10, %c0_i32_9 : i32
    scf.if %11 {
      %c0_10 = arith.constant 0 : index
      %c0_11 = arith.constant 0 : index
      %12 = vector.load %arg6[%c0_10, %c0_11] : memref<128x128xf32, #tpu.memory_space<vmem>>, vector<128x128xf32>
      %13 = arith.truncf %12 : vector<128x128xf32> to vector<128x128xbf16>
      %c0_12 = arith.constant 0 : index
      %c0_13 = arith.constant 0 : index
      %14 = vector.load %arg5[%c0_12, %c0_13] : memref<128x128xbf16, #tpu.memory_space<vmem>>, vector<128x128xbf16>
      tpu.vector_store %arg5[%c0_12, %c0_13], %13 {strides = array<i32>} : memref<128x128xbf16, #tpu.memory_space<vmem>>, vector<128x128xbf16>,
    } else {
    }
    return
  }
  func.func @transform_0(%arg0: i32, %arg1: i32, %arg2: i32) -> (i32, i32) {
    %c0_i32 = arith.constant 0 : i32
    return %arg0, %arg2 : i32, i32
  }
  func.func @transform_1(%arg0: i32, %arg1: i32, %arg2: i32) -> (i32, i32) {
    %c0_i32 = arith.constant 0 : i32
    return %arg2, %arg1 : i32, i32
  }
  func.func @transform_2(%arg0: i32, %arg1: i32, %arg2: i32) -> (i32, i32) {
    %c0_i32 = arith.constant 0 : i32
    return %arg0, %arg1 : i32, i32
  }
}

</mosaic_0001>

<llo_original>
// kernel: tpu_custom_call.1
$region0: #{tpu_custom_call.1}
  #allocation0 [shape = 'u32[]', space=smem, size = 0x4, offset = 0x4, fixed_abs, tag = 'smem constant byte address 0x4 - core index']
  #allocation1 [shape = 'u32[144,128]{1,0:T(1,128)}', space=vmem, size = 0x12000, scoped, tag = 'internal scratch']
  #allocation2 [shape = 'f32[128,128]{1,0:T(8,128)}', space=vmem, size = 0x10000, scoped, tag = 'scratch operand']
  %s0 = inlined_call_operand.vmem [shape: bf16[128,32], index: 0, kind: input, shape index: {}]
  %s1 = inlined_call_operand.vmem [shape: bf16[32,128], index: 1, kind: input, shape index: {}]
  %s2 = inlined_call_operand.hbm [shape: bf16[128,128], index: 2, kind: output, shape index: {}]
  %s3 = sld [smem:[#allocation0]]
  $region26: #{tpu_custom_call.1} parent=0
    _
  %s5 = ssub.s32 1, %s3
  %s6 = scalar_select 0, %s5, %s3
  $region1: #{tpu_custom_call.1} parent=0
    #allocation3 [shape = 'u8[32768]{0}', space=vmem, size = 0x8000, scoped, tag = 'output window, operand 0, single buffered']
    #allocation4 [shape = 's32[1]{0}', space=sflag, size = 0x4, scoped, tag = 'scoped memory for tpu_custom_call.1']
    %7 = vsyncpa [#allocation4], 0
    // Predicated region
    $region2: #{tpu_custom_call.1} parent=1 // pred_check
      _
    $region3: #{tpu_custom_call.1} parent=1 // pred_check_branch
      %9 = sbr.rel (0) target = $region5
    $region4: #{tpu_custom_call.1} parent=1 // pred_region
      _
    $region5: #{tpu_custom_call.1} parent=1 // pred_fallthru
      _
    // Predicated region
    $region6: #{tpu_custom_call.1} parent=1 // pred_check
      _
    $region7: #{tpu_custom_call.1} parent=1 // pred_check_branch
      %11 = sbr.rel (0) target = $region9
    $region8: #{tpu_custom_call.1} parent=1 // pred_region
      _
    $region9: #{tpu_custom_call.1} parent=1 // pred_fallthru
      _
    %p13 = scmp.eq.s32.totalorder 0, 0
    // Predicated region
    $region10: #{tpu_custom_call.1} parent=1 // pred_check
      %p14 = pneg %p13
    $region11: #{tpu_custom_call.1} parent=1 // pred_check_branch
      %16 = sbr.rel (%p14) target = $region13
    $region12: #{tpu_custom_call.1} parent=1 // pred_region
      %17 = vst [vmem:[#allocation2] sm:$0xff] 0.0
      %18 = vst [vmem:[#allocation2 + $0x8] sm:$0xff] 0.0
      %19 = vst [vmem:[#allocation2 + $0x10] sm:$0xff] 0.0
      %20 = vst [vmem:[#allocation2 + $0x18] sm:$0xff] 0.0
      %21 = vst [vmem:[#allocation2 + $0x20] sm:$0xff] 0.0
      %22 = vst [vmem:[#allocation2 + $0x28] sm:$0xff] 0.0
      %23 = vst [vmem:[#allocation2 + $0x30] sm:$0xff] 0.0
      %24 = vst [vmem:[#allocation2 + $0x38] sm:$0xff] 0.0
      %25 = vst [vmem:[#allocation2 + $0x40] sm:$0xff] 0.0
      %26 = vst [vmem:[#allocation2 + $0x48] sm:$0xff] 0.0
      %27 = vst [vmem:[#allocation2 + $0x50] sm:$0xff] 0.0
      %28 = vst [vmem:[#allocation2 + $0x58] sm:$0xff] 0.0
      %29 = vst [vmem:[#allocation2 + $0x60] sm:$0xff] 0.0
      %30 = vst [vmem:[#allocation2 + $0x68] sm:$0xff] 0.0
      %31 = vst [vmem:[#allocation2 + $0x70] sm:$0xff] 0.0
      %32 = vst [vmem:[#allocation2 + $0x78] sm:$0xff] 0.0
    $region13: #{tpu_custom_call.1} parent=1 // pred_fallthru
      _
    %v33 = vld [vmem:[#allocation2] sm:$0xff]
    %v34 = vld [vmem:[#allocation2 + $0x8] sm:$0xff]
    %v35 = vld [vmem:[#allocation2 + $0x10] sm:$0xff]
    %v36 = vld [vmem:[#allocation2 + $0x18] sm:$0xff]
    %v37 = vld [vmem:[#allocation2 + $0x20] sm:$0xff]
    %v38 = vld [vmem:[#allocation2 + $0x28] sm:$0xff]
    %v39 = vld [vmem:[#allocation2 + $0x30] sm:$0xff]
    %v40 = vld [vmem:[#allocation2 + $0x38] sm:$0xff]
    %v41 = vld [vmem:[#allocation2 + $0x40] sm:$0xff]
    %v42 = vld [vmem:[#allocation2 + $0x48] sm:$0xff]
    %v43 = vld [vmem:[#allocation2 + $0x50] sm:$0xff]
    %v44 = vld [vmem:[#allocation2 + $0x58] sm:$0xff]
    %v45 = vld [vmem:[#allocation2 + $0x60] sm:$0xff]
    %v46 = vld [vmem:[#allocation2 + $0x68] sm:$0xff]
    %v47 = vld [vmem:[#allocation2 + $0x70] sm:$0xff]
    %v48 = vld [vmem:[#allocation2 + $0x78] sm:$0xff]
    %v49 = vld [vmem:[%s0] sm:$0xf]
    %v50 = vld [vmem:[%s0 + $0x4] sm:$0xf]
    %v51 = vld [vmem:[%s0 + $0x8] sm:$0xf]
    %v52 = vld [vmem:[%s0 + $0xc] sm:$0xf]
    %v53 = vld [vmem:[%s0 + $0x10] sm:$0xf]
    %v54 = vld [vmem:[%s0 + $0x14] sm:$0xf]
    %v55 = vld [vmem:[%s0 + $0x18] sm:$0xf]
    %v56 = vld [vmem:[%s0 + $0x1c] sm:$0xf]
    %v57 = vld [vmem:[%s0 + $0x20] sm:$0xf]
    %v58 = vld [vmem:[%s0 + $0x24] sm:$0xf]
    %v59 = vld [vmem:[%s0 + $0x28] sm:$0xf]
    %v60 = vld [vmem:[%s0 + $0x2c] sm:$0xf]
    %v61 = vld [vmem:[%s0 + $0x30] sm:$0xf]
    %v62 = vld [vmem:[%s0 + $0x34] sm:$0xf]
    %v63 = vld [vmem:[%s0 + $0x38] sm:$0xf]
    %v64 = vld [vmem:[%s0 + $0x3c] sm:$0xf]
    %v65 = vld [vmem:[%s1] sm:$0xf]
    %v66 = vld [vmem:[%s1 + $0x4] sm:$0xf]
    %v67 = vld [vmem:[%s1 + $0x8] sm:$0xf]
    %v68 = vld [vmem:[%s1 + $0xc] sm:$0xf]
    %v85 = vunpack.c.l.b16 %v49
    %v86 = vunpack.c.l.b16 %v50
    %v87 = vunpack.c.l.b16 %v51
    %v88 = vunpack.c.l.b16 %v52
    %v89 = vunpack.c.l.b16 %v53
    %v90 = vunpack.c.l.b16 %v54
    %v91 = vunpack.c.l.b16 %v55
    %v92 = vunpack.c.l.b16 %v56
    %v93 = vunpack.c.l.b16 %v57
    %v94 = vunpack.c.l.b16 %v58
    %v95 = vunpack.c.l.b16 %v59
    %v96 = vunpack.c.l.b16 %v60
    %v97 = vunpack.c.l.b16 %v61
    %v98 = vunpack.c.l.b16 %v62
    %v99 = vunpack.c.l.b16 %v63
    %v100 = vunpack.c.l.b16 %v64
    %v101 = vpack.c.b16 %v86, %v85
    %v102 = vpack.c.b16 %v88, %v87
    %v103 = vpack.c.b16 %v90, %v89
    %v104 = vpack.c.b16 %v92, %v91
    %v105 = vpack.c.b16 %v94, %v93
    %v106 = vpack.c.b16 %v96, %v95
    %v107 = vpack.c.b16 %v98, %v97
    %v108 = vpack.c.b16 %v100, %v99
    %v113 = vunpack.c.l.b16 %v65
    %v114 = vunpack.c.l.b16 %v66
    %v115 = vunpack.c.l.b16 %v67
    %v116 = vunpack.c.l.b16 %v68
    %v117 = vpack.c.b16 %v114, %v113
    %v118 = vpack.c.b16 %v116, %v115
    %vm121 = vcmask 261120
    %v123 = vsel %vm121, %v101, 0
    %v126 = vsel %vm121, %v102, 0
    %v129 = vsel %vm121, %v103, 0
    %v132 = vsel %vm121, %v104, 0
    %v135 = vsel %vm121, %v105, 0
    %v138 = vsel %vm121, %v106, 0
    %v141 = vsel %vm121, %v107, 0
    %v144 = vsel %vm121, %v108, 0
    %146 = vmatprep.subr.bf16.mxu0 0
    %147 = vmatpush1.bf16.msra.mxu0 %v117
    %148 = vmatprep.subr.bf16.mxu0 0
    %149 = vmatpush1.bf16.msra.mxu0 %v118
    %150 = vmatprep.subr.bf16.mxu0 0
    %151 = vmatpush1.bf16.msra.mxu0 0
    %152 = vmatprep.subr.bf16.mxu0 0
    %153 = vmatpush1.bf16.msra.mxu0 0
    %154 = vmatprep.subr.bf16.mxu0 0
    %155 = vmatpush1.bf16.msra.mxu0 0
    %156 = vmatprep.subr.bf16.mxu0 0
    %157 = vmatpush1.bf16.msra.mxu0 0
    %158 = vmatprep.subr.bf16.mxu0 0
    %159 = vmatpush1.bf16.msra.mxu0 0
    %160 = vmatprep.subr.bf16.mxu0 0
    %161 = vmatpush1.bf16.msra.mxu0 0
    %162 = vmatprep.subr.bf16.mxu0 0
    %163 = vmatpush1.bf16.msra.mxu0 0
    %164 = vmatprep.subr.bf16.mxu0 0
    %165 = vmatpush1.bf16.msra.mxu0 0
    %166 = vmatprep.subr.bf16.mxu0 0
    %167 = vmatpush1.bf16.msra.mxu0 0
    %168 = vmatprep.subr.bf16.mxu0 0
    %169 = vmatpush1.bf16.msra.mxu0 0
    %170 = vmatprep.subr.bf16.mxu0 0
    %171 = vmatpush1.bf16.msra.mxu0 0
    %172 = vmatprep.subr.bf16.mxu0 0
    %173 = vmatpush1.bf16.msra.mxu0 0
    %174 = vmatprep.subr.bf16.mxu0 0
    %175 = vmatpush1.bf16.msra.mxu0 0
    %176 = vmatprep.subr.bf16.mxu0 0
    %177 = vmatpush1.bf16.msra.mxu0 0
    %178 = vmatprep.mubr.bf16.mxu0 0
    %179 = vmatmul.mubr.bf16.gmra.mrb[0].mxu0 %v123
    %v180 = vpop.f32.mrb[0].mxu0
    %v181 = vadd.f32 0.0, %v180
    %v182 = vpop.f32.mrb[0].mxu0
    %v183 = vpop.f32.mrb[0].mxu0
    %v184 = vadd.f32 0.0, %v183
    %v185 = vpop.f32.mrb[0].mxu0
    %186 = vmatprep.mubr.bf16.mxu0 0
    %187 = vmatmul.mubr.bf16.gmra.mrb[0].mxu0 %v126
    %v188 = vpop.f32.mrb[0].mxu0
    %v189 = vadd.f32 0.0, %v188
    %v190 = vpop.f32.mrb[0].mxu0
    %v191 = vpop.f32.mrb[0].mxu0
    %v192 = vadd.f32 0.0, %v191
    %v193 = vpop.f32.mrb[0].mxu0
    %194 = vmatprep.mubr.bf16.mxu0 0
    %195 = vmatmul.mubr.bf16.gmra.mrb[0].mxu0 %v129
    %v196 = vpop.f32.mrb[0].mxu0
    %v197 = vadd.f32 0.0, %v196
    %v198 = vpop.f32.mrb[0].mxu0
    %v199 = vpop.f32.mrb[0].mxu0
    %v200 = vadd.f32 0.0, %v199
    %v201 = vpop.f32.mrb[0].mxu0
    %202 = vmatprep.mubr.bf16.mxu0 0
    %203 = vmatmul.mubr.bf16.gmra.mrb[0].mxu0 %v132
    %v204 = vpop.f32.mrb[0].mxu0
    %v205 = vadd.f32 0.0, %v204
    %v206 = vpop.f32.mrb[0].mxu0
    %v207 = vpop.f32.mrb[0].mxu0
    %v208 = vadd.f32 0.0, %v207
    %v209 = vpop.f32.mrb[0].mxu0
    %210 = vmatprep.mubr.bf16.mxu0 0
    %211 = vmatmul.mubr.bf16.gmra.mrb[0].mxu0 %v135
    %v212 = vpop.f32.mrb[0].mxu0
    %v213 = vadd.f32 0.0, %v212
    %v214 = vpop.f32.mrb[0].mxu0
    %v215 = vpop.f32.mrb[0].mxu0
    %v216 = vadd.f32 0.0, %v215
    %v217 = vpop.f32.mrb[0].mxu0
    %218 = vmatprep.mubr.bf16.mxu0 0
    %219 = vmatmul.mubr.bf16.gmra.mrb[0].mxu0 %v138
    %v220 = vpop.f32.mrb[0].mxu0
    %v221 = vadd.f32 0.0, %v220
    %v222 = vpop.f32.mrb[0].mxu0
    %v223 = vpop.f32.mrb[0].mxu0
    %v224 = vadd.f32 0.0, %v223
    %v225 = vpop.f32.mrb[0].mxu0
    %226 = vmatprep.mubr.bf16.mxu0 0
    %227 = vmatmul.mubr.bf16.gmra.mrb[0].mxu0 %v141
    %v228 = vpop.f32.mrb[0].mxu0
    %v229 = vadd.f32 0.0, %v228
    %v230 = vpop.f32.mrb[0].mxu0
    %v231 = vpop.f32.mrb[0].mxu0
    %v232 = vadd.f32 0.0, %v231
    %v233 = vpop.f32.mrb[0].mxu0
    %234 = vmatprep.mubr.bf16.mxu0 0
    %235 = vmatmul.mubr.bf16.gmra.mrb[0].mxu0 %v144
    %v236 = vpop.f32.mrb[0].mxu0
    %v237 = vadd.f32 0.0, %v236
    %v238 = vpop.f32.mrb[0].mxu0
    %v239 = vpop.f32.mrb[0].mxu0
    %v240 = vadd.f32 0.0, %v239
    %v241 = vpop.f32.mrb[0].mxu0
    %242 = vdwg.mxu0
    %v243 = vadd.f32 %v33, %v181
    %v244 = vadd.f32 %v34, %v184
    %v245 = vadd.f32 %v35, %v189
    %v246 = vadd.f32 %v36, %v192
    %v247 = vadd.f32 %v37, %v197
    %v248 = vadd.f32 %v38, %v200
    %v249 = vadd.f32 %v39, %v205
    %v250 = vadd.f32 %v40, %v208
    %v251 = vadd.f32 %v41, %v213
    %v252 = vadd.f32 %v42, %v216
    %v253 = vadd.f32 %v43, %v221
    %v254 = vadd.f32 %v44, %v224
    %v255 = vadd.f32 %v45, %v229
    %v256 = vadd.f32 %v46, %v232
    %v257 = vadd.f32 %v47, %v237
    %v258 = vadd.f32 %v48, %v240
    %259 = vst [vmem:[#allocation2] sm:$0xff] %v243
    %260 = vst [vmem:[#allocation2 + $0x8] sm:$0xff] %v244
    %261 = vst [vmem:[#allocation2 + $0x10] sm:$0xff] %v245
    %262 = vst [vmem:[#allocation2 + $0x18] sm:$0xff] %v246
    %263 = vst [vmem:[#allocation2 + $0x20] sm:$0xff] %v247
    %264 = vst [vmem:[#allocation2 + $0x28] sm:$0xff] %v248
    %265 = vst [vmem:[#allocation2 + $0x30] sm:$0xff] %v249
    %266 = vst [vmem:[#allocation2 + $0x38] sm:$0xff] %v250
    %267 = vst [vmem:[#allocation2 + $0x40] sm:$0xff] %v251
    %268 = vst [vmem:[#allocation2 + $0x48] sm:$0xff] %v252
    %269 = vst [vmem:[#allocation2 + $0x50] sm:$0xff] %v253
    %270 = vst [vmem:[#allocation2 + $0x58] sm:$0xff] %v254
    %271 = vst [vmem:[#allocation2 + $0x60] sm:$0xff] %v255
    %272 = vst [vmem:[#allocation2 + $0x68] sm:$0xff] %v256
    %273 = vst [vmem:[#allocation2 + $0x70] sm:$0xff] %v257
    %274 = vst [vmem:[#allocation2 + $0x78] sm:$0xff] %v258
    // Predicated region
    $region14: #{tpu_custom_call.1} parent=1 // pred_check
      %p275 = pneg %p13
    $region15: #{tpu_custom_call.1} parent=1 // pred_check_branch
      %277 = sbr.rel (%p275) target = $region17
    $region16: #{tpu_custom_call.1} parent=1 // pred_region
      %v278 = vld [vmem:[#allocation2] sm:$0xff]
      %v279 = vld [vmem:[#allocation2 + $0x8] sm:$0xff]
      %v280 = vld [vmem:[#allocation2 + $0x10] sm:$0xff]
      %v281 = vld [vmem:[#allocation2 + $0x18] sm:$0xff]
      %v282 = vld [vmem:[#allocation2 + $0x20] sm:$0xff]
      %v283 = vld [vmem:[#allocation2 + $0x28] sm:$0xff]
      %v284 = vld [vmem:[#allocation2 + $0x30] sm:$0xff]
      %v285 = vld [vmem:[#allocation2 + $0x38] sm:$0xff]
      %v286 = vld [vmem:[#allocation2 + $0x40] sm:$0xff]
      %v287 = vld [vmem:[#allocation2 + $0x48] sm:$0xff]
      %v288 = vld [vmem:[#allocation2 + $0x50] sm:$0xff]
      %v289 = vld [vmem:[#allocation2 + $0x58] sm:$0xff]
      %v290 = vld [vmem:[#allocation2 + $0x60] sm:$0xff]
      %v291 = vld [vmem:[#allocation2 + $0x68] sm:$0xff]
      %v292 = vld [vmem:[#allocation2 + $0x70] sm:$0xff]
      %v293 = vld [vmem:[#allocation2 + $0x78] sm:$0xff]
      %v294 = vpack.c.bf16 %v279, %v278
      %v295 = vpack.c.bf16 %v281, %v280
      %v296 = vpack.c.bf16 %v283, %v282
      %v297 = vpack.c.bf16 %v285, %v284
      %v298 = vpack.c.bf16 %v287, %v286
      %v299 = vpack.c.bf16 %v289, %v288
      %v300 = vpack.c.bf16 %v291, %v290
      %v301 = vpack.c.bf16 %v293, %v292
      %v310 = vunpack.c.l.b16 %v294
      %v311 = vunpack.c.h.b16 %v294
      %v312 = vunpack.c.l.b16 %v295
      %v313 = vunpack.c.h.b16 %v295
      %v314 = vunpack.c.l.b16 %v296
      %v315 = vunpack.c.h.b16 %v296
      %v316 = vunpack.c.l.b16 %v297
      %v317 = vunpack.c.h.b16 %v297
      %v318 = vunpack.c.l.b16 %v298
      %v319 = vunpack.c.h.b16 %v298
      %v320 = vunpack.c.l.b16 %v299
      %v321 = vunpack.c.h.b16 %v299
      %v322 = vunpack.c.l.b16 %v300
      %v323 = vunpack.c.h.b16 %v300
      %v324 = vunpack.c.l.b16 %v301
      %v325 = vunpack.c.h.b16 %v301
      %v326 = vpack.c.b16 %v310, %v310
      %v327 = vpack.c.b16 %v311, %v311
      %v328 = vpack.c.b16 %v312, %v312
      %v329 = vpack.c.b16 %v313, %v313
      %v330 = vpack.c.b16 %v314, %v314
      %v331 = vpack.c.b16 %v315, %v315
      %v332 = vpack.c.b16 %v316, %v316
      %v333 = vpack.c.b16 %v317, %v317
      %v334 = vpack.c.b16 %v318, %v318
      %v335 = vpack.c.b16 %v319, %v319
      %v336 = vpack.c.b16 %v320, %v320
      %v337 = vpack.c.b16 %v321, %v321
      %v338 = vpack.c.b16 %v322, %v322
      %v339 = vpack.c.b16 %v323, %v323
      %v340 = vpack.c.b16 %v324, %v324
      %v341 = vpack.c.b16 %v325, %v325
      %358 = vst [vmem:[#allocation3] sm:$0xf] %v326
      %359 = vst [vmem:[#allocation3 + $0x4] sm:$0xf] %v327
      %360 = vst [vmem:[#allocation3 + $0x8] sm:$0xf] %v328
      %361 = vst [vmem:[#allocation3 + $0xc] sm:$0xf] %v329
      %362 = vst [vmem:[#allocation3 + $0x10] sm:$0xf] %v330
      %363 = vst [vmem:[#allocation3 + $0x14] sm:$0xf] %v331
      %364 = vst [vmem:[#allocation3 + $0x18] sm:$0xf] %v332
      %365 = vst [vmem:[#allocation3 + $0x1c] sm:$0xf] %v333
      %366 = vst [vmem:[#allocation3 + $0x20] sm:$0xf] %v334
      %367 = vst [vmem:[#allocation3 + $0x24] sm:$0xf] %v335
      %368 = vst [vmem:[#allocation3 + $0x28] sm:$0xf] %v336
      %369 = vst [vmem:[#allocation3 + $0x2c] sm:$0xf] %v337
      %370 = vst [vmem:[#allocation3 + $0x30] sm:$0xf] %v338
      %371 = vst [vmem:[#allocation3 + $0x34] sm:$0xf] %v339
      %372 = vst [vmem:[#allocation3 + $0x38] sm:$0xf] %v340
      %373 = vst [vmem:[#allocation3 + $0x3c] sm:$0xf] %v341
    $region17: #{tpu_custom_call.1} parent=1 // pred_fallthru
      _
    // Predicated region
    $region18: #{tpu_custom_call.1} parent=1 // pred_check
      _
    $region19: #{tpu_custom_call.1} parent=1 // pred_check_branch
      %375 = sbr.rel (0) target = $region21
    $region20: #{tpu_custom_call.1} parent=1 // pred_region
      %s377 = ssub.s32 1024, 1024
      %378 = vsyncadd [#allocation4], %s377
      %s379 = sshll.u32 [#allocation3], 4
      %s380 = int_to_ptr.vmem [resolvable:$true] %s379
      %385 = dma.vmem_to_hbm [thread:$0]  %s380, 1024, %s2, [#allocation4], 64, 64, 4
    $region21: #{tpu_custom_call.1} parent=1 // pred_fallthru
      _
    // Predicated region
    $region22: #{tpu_custom_call.1} parent=1 // pred_check
      _
    $region23: #{tpu_custom_call.1} parent=1 // pred_check_branch
      %387 = sbr.rel (0) target = $region25
    $region24: #{tpu_custom_call.1} parent=1 // pred_region
      %388 = dma.done [#allocation4], 1024
    $region25: #{tpu_custom_call.1} parent=1 // pred_fallthru
      _
    %389 = vsyncpa [#allocation4], 1

</llo_original>
